<compile_context>
chip_gen: v7x
topology: tpu7x:2x2x1
jax: 0.10.0
libtpu: 0.0.40
codegen_flags: <defaults>
</compile_context>

<pallas_src>
import functools

import jax
import jax.numpy as jnp
from jax.experimental import pallas as pl
from jax.experimental.pallas import tpu as pltpu


def _ce_weighted_kernel(n_pix, tile_n,
                        x_ref, lab_ref, w_ref,
                        num_ref, den_ref,
                        num_acc, den_acc):
    j = pl.program_id(1)

    @pl.when(j == 0)
    def _():
        num_acc[...] = jnp.zeros_like(num_acc)
        den_acc[...] = jnp.zeros_like(den_acc)

    x = x_ref[...].astype(jnp.float32)        # (C, T)  classes on sublanes
    lab = lab_ref[...]                        # (1, T)  int32
    wcol = w_ref[...]                         # (C, 1)  float32

    # Stable log-softmax over the (small) class / sublane axis, computed packed
    # so exp processes full (C, T) vregs (EUP-efficient).
    m = jnp.max(x, axis=0, keepdims=True)                     # (1, T)
    e = jnp.exp(x - m)                                        # (C, T)
    lse = jnp.log(jnp.sum(e, axis=0, keepdims=True)) + m      # (1, T)

    # One-hot (over sublanes) pick of the label logit and its class weight.
    cls = jax.lax.broadcasted_iota(jnp.int32, x.shape, 0)     # (C, T)
    onehot = cls == lab                                       # (C, T)
    picked = jnp.sum(jnp.where(onehot, x, 0.0), axis=0, keepdims=True)
    w = jnp.sum(jnp.where(onehot, wcol, 0.0), axis=0, keepdims=True)
    # Out-of-range labels get picked = 0, w = 0 -> contribute nothing
    # (torch would raise instead).

    loss = lse - picked                                       # (1, T)
    contrib = w * loss

    if n_pix % tile_n != 0:
        # Mask the padded tail of the last (partial) pixel block.
        pix = j * tile_n + jax.lax.broadcasted_iota(jnp.int32, (1, tile_n), 1)
        valid = pix < n_pix
        w = jnp.where(valid, w, 0.0)
        contrib = jnp.where(valid, contrib, 0.0)

    # Pure-VPU elementwise accumulation in the hot loop.
    num_acc[...] += contrib
    den_acc[...] += w

    @pl.when(j == pl.num_programs(1) - 1)
    def _():
        # Single cross-lane reduction, once per batch row.
        num_ref[...] = jnp.sum(num_acc[...], axis=1, keepdims=True)
        den_ref[...] = jnp.sum(den_acc[...], axis=1, keepdims=True)


def _choose_tile_n(num_classes, n_pix, max_block_bytes=2 << 20, max_tile=1 << 16):
    """Biggest lane-dense tile that keeps the logits block <= ~2 MiB."""
    t = max(128, min(max_tile, max_block_bytes // (4 * num_classes)))
    t = (t // 128) * 128
    if n_pix <= t:
        return n_pix          # one full-width block (any N allowed)
    return t                  # multiple of 128; partial tail masked in-kernel


def cross_entropy_weighted(x, label, weights, tile_n=None):
    """x: (B, C, H, W) float logits (NCHW); label: (B, H, W) int class ids."""
    B, C, H, W = x.shape
    N = H * W

    # Free reshapes only -- no transpose, no extra HBM pass.
    # (Feeding bf16 logits here would halve HBM traffic; compute stays f32.)
    logits = x.reshape(B, C, N)
    lab = label.reshape(B, 1, N).astype(jnp.int32)
    wcol = weights.reshape(C, 1).astype(jnp.float32)

    if tile_n is None:
        tile_n = _choose_tile_n(C, N)
    n_blocks = pl.cdiv(N, tile_n)

    kernel = functools.partial(_ce_weighted_kernel, N, tile_n)

    num, den = pl.pallas_call(
        kernel,
        out_shape=(jax.ShapeDtypeStruct((B, 1, 1), jnp.float32),
                   jax.ShapeDtypeStruct((B, 1, 1), jnp.float32)),
        grid_spec=pltpu.PrefetchScalarGridSpec(
            num_scalar_prefetch=0,
            grid=(B, n_blocks),
            in_specs=[
                pl.BlockSpec((None, C, tile_n), lambda b, j: (b, 0, j)),
                pl.BlockSpec((None, 1, tile_n), lambda b, j: (b, 0, j)),
                pl.BlockSpec((C, 1), lambda b, j: (0, 0)),
            ],
            out_specs=[
                pl.BlockSpec((None, 1, 1), lambda b, j: (b, 0, 0)),
                pl.BlockSpec((None, 1, 1), lambda b, j: (b, 0, 0)),
            ],
            scratch_shapes=[
                pltpu.VMEM((1, tile_n), jnp.float32),
                pltpu.VMEM((1, tile_n), jnp.float32),
            ],
        ),
        compiler_params=pltpu.CompilerParams(
            dimension_semantics=("parallel", "arbitrary")),
    )(logits, lab, wcol)

    # NaN if every pixel carries the zero-weight class (matches torch's 0/0).
    loss = jnp.sum(num) / jnp.sum(den)
    return {"cross_entropy_loss": loss}


def reference_loss(x, label, weights):
    """Pure-JAX reference matching torch F.cross_entropy(weight=w, 'mean')."""
    B, C, H, W = x.shape
    logits = jnp.transpose(x, (0, 2, 3, 1)).reshape(-1, C).astype(jnp.float32)
    lab = label.reshape(-1).astype(jnp.int32)
    logp = jax.nn.log_softmax(logits, axis=-1)
    nll = -jnp.take_along_axis(logp, lab[:, None], axis=-1)[:, 0]
    w = weights[lab]
    return jnp.sum(w * nll) / jnp.sum(w)


if __name__ == "__main__":
    num_classes = 4
    B, H, W = 2, 16, 16

    # deterministic parameter init, mirroring CrossEntropyWeighted.__init__
    weights = jnp.ones((num_classes,), dtype=jnp.float32).at[-1].set(0.0)

    key = jax.random.PRNGKey(0)
    kx, ky = jax.random.split(key)
    x = jax.random.normal(kx, (B, num_classes, H, W), dtype=jnp.float32)
    label = jax.random.randint(ky, (B, H, W), 0, num_classes, dtype=jnp.int32)

    out = cross_entropy_weighted(x, label, weights)
    loss = jax.block_until_ready(out["cross_entropy_loss"])

    ref = reference_loss(x, label, weights)
    assert jnp.allclose(loss, ref, rtol=1e-5, atol=1e-5), (loss, ref)

    print("KERNEL_OK")
</pallas_src>

<mosaic_0001>
module attributes {stable_mosaic.version = 11 : i64} {
  func.func @_ce_weighted_kernel(%arg0: i32, %arg1: i32, %arg2: memref<1x4x256xf32, #tpu.memory_space<vmem>>, %arg3: memref<1x1x256xi32, #tpu.memory_space<vmem>>, %arg4: memref<4x1xf32, #tpu.memory_space<vmem>>, %arg5: memref<1x1x1xf32, #tpu.memory_space<vmem>>, %arg6: memref<1x1x1xf32, #tpu.memory_space<vmem>>, %arg7: memref<1x256xf32, #tpu.memory_space<vmem>>, %arg8: memref<1x256xf32, #tpu.memory_space<vmem>>) attributes {dimension_semantics = [#tpu.dimension_semantics<parallel>, #tpu.dimension_semantics<arbitrary>], iteration_bounds = array<i64: 2, 1>, scalar_prefetch = 0 : i64, scratch_operands = 2 : i64, tpu.core_type = #tpu.core_type<tc>, window_params = [{transform_indices = @transform_0, window_bounds = array<i64: 1, 4, 256>}, {transform_indices = @transform_1, window_bounds = array<i64: 1, 1, 256>}, {pipeline_mode = #tpu.pipeline_mode<synchronous>, transform_indices = @transform_2, window_bounds = array<i64: 4, 1>}, {transform_indices = @transform_3, window_bounds = array<i64: 1, 1, 1>}, {transform_indices = @transform_4, window_bounds = array<i64: 1, 1, 1>}]} {
    %c0_i32 = arith.constant 0 : i32
    %0 = arith.cmpi eq, %arg1, %c0_i32 : i32
    %1 = arith.extui %0 : i1 to i32
    %c0_i32_0 = arith.constant 0 : i32
    %2 = arith.cmpi ne, %1, %c0_i32_0 : i32
    scf.if %2 {
      %cst_23 = arith.constant 0.000000e+00 : f32
      %41 = vector.broadcast %cst_23 : f32 to vector<1x256xf32>
      %c0_24 = arith.constant 0 : index
      %c0_25 = arith.constant 0 : index
      %42 = vector.load %arg7[%c0_24, %c0_25] : memref<1x256xf32, #tpu.memory_space<vmem>>, vector<1x256xf32>
      tpu.vector_store %arg7[%c0_24, %c0_25], %41 {strides = array<i32>} : memref<1x256xf32, #tpu.memory_space<vmem>>, vector<1x256xf32>,
      %cst_26 = arith.constant 0.000000e+00 : f32
      %43 = vector.broadcast %cst_26 : f32 to vector<1x256xf32>
      %c0_27 = arith.constant 0 : index
      %c0_28 = arith.constant 0 : index
      %44 = vector.load %arg8[%c0_27, %c0_28] : memref<1x256xf32, #tpu.memory_space<vmem>>, vector<1x256xf32>
      tpu.vector_store %arg8[%c0_27, %c0_28], %43 {strides = array<i32>} : memref<1x256xf32, #tpu.memory_space<vmem>>, vector<1x256xf32>,
    } else {
    }
    %c0 = arith.constant 0 : index
    %c0_1 = arith.constant 0 : index
    %c0_2 = arith.constant 0 : index
    %3 = vector.load %arg2[%c0, %c0_1, %c0_2] : memref<1x4x256xf32, #tpu.memory_space<vmem>>, vector<1x4x256xf32>
    %4 = vector.shape_cast %3 : vector<1x4x256xf32> to vector<4x256xf32>
    %c0_3 = arith.constant 0 : index
    %c0_4 = arith.constant 0 : index
    %c0_5 = arith.constant 0 : index
    %5 = vector.load %arg3[%c0_3, %c0_4, %c0_5] : memref<1x1x256xi32, #tpu.memory_space<vmem>>, vector<1x1x256xi32>
    %6 = vector.shape_cast %5 : vector<1x1x256xi32> to vector<1x256xi32>
    %c0_6 = arith.constant 0 : index
    %c0_7 = arith.constant 0 : index
    %7 = vector.load %arg4[%c0_6, %c0_7] : memref<4x1xf32, #tpu.memory_space<vmem>>, vector<4x1xf32>
    %cst = arith.constant dense<0xFF800000> : vector<256xf32>
    %8 = vector.multi_reduction <maximumf>, %4, %cst [0] : vector<4x256xf32> to vector<256xf32>
    %9 = vector.shape_cast %8 : vector<256xf32> to vector<1x256xf32>
    %10 = vector.broadcast %9 : vector<1x256xf32> to vector<4x256xf32>
    %11 = arith.subf %4, %10 : vector<4x256xf32>
    %12 = math.exp %11 : vector<4x256xf32>
    %cst_8 = arith.constant dense<0.000000e+00> : vector<256xf32>
    %13 = vector.multi_reduction <add>, %12, %cst_8 [0] : vector<4x256xf32> to vector<256xf32>
    %14 = vector.shape_cast %13 : vector<256xf32> to vector<1x256xf32>
    %15 = math.log %14 : vector<1x256xf32>
    %16 = arith.addf %15, %9 : vector<1x256xf32>
    %17 = tpu.iota {dimensions = array<i32: 0>} : vector<4x256xi32>
    %18 = vector.broadcast %6 : vector<1x256xi32> to vector<4x256xi32>
    %19 = arith.cmpi eq, %17, %18 : vector<4x256xi32>
    %cst_9 = arith.constant 0.000000e+00 : f32
    %20 = vector.broadcast %cst_9 : f32 to vector<4x256xf32>
    %21 = arith.select %19, %4, %20 : vector<4x256xi1>, vector<4x256xf32>
    %cst_10 = arith.constant dense<0.000000e+00> : vector<256xf32>
    %22 = vector.multi_reduction <add>, %21, %cst_10 [0] : vector<4x256xf32> to vector<256xf32>
    %23 = vector.shape_cast %22 : vector<256xf32> to vector<1x256xf32>
    %cst_11 = arith.constant 0.000000e+00 : f32
    %24 = vector.shape_cast %7 : vector<4x1xf32> to vector<4x1xf32>
    %25 = vector.broadcast %24 : vector<4x1xf32> to vector<4x256xf32>
    %26 = vector.broadcast %cst_11 : f32 to vector<4x256xf32>
    %27 = arith.select %19, %25, %26 : vector<4x256xi1>, vector<4x256xf32>
    %cst_12 = arith.constant dense<0.000000e+00> : vector<256xf32>
    %28 = vector.multi_reduction <add>, %27, %cst_12 [0] : vector<4x256xf32> to vector<256xf32>
    %29 = vector.shape_cast %28 : vector<256xf32> to vector<1x256xf32>
    %30 = arith.subf %16, %23 : vector<1x256xf32>
    %31 = arith.mulf %29, %30 : vector<1x256xf32>
    %c0_13 = arith.constant 0 : index
    %c0_14 = arith.constant 0 : index
    %32 = vector.load %arg7[%c0_13, %c0_14] : memref<1x256xf32, #tpu.memory_space<vmem>>, vector<1x256xf32>
    %33 = arith.addf %32, %31 : vector<1x256xf32>
    %c0_15 = arith.constant 0 : index
    %c0_16 = arith.constant 0 : index
    %34 = vector.load %arg7[%c0_15, %c0_16] : memref<1x256xf32, #tpu.memory_space<vmem>>, vector<1x256xf32>
    tpu.vector_store %arg7[%c0_15, %c0_16], %33 {strides = array<i32>} : memref<1x256xf32, #tpu.memory_space<vmem>>, vector<1x256xf32>,
    %c0_17 = arith.constant 0 : index
    %c0_18 = arith.constant 0 : index
    %35 = vector.load %arg8[%c0_17, %c0_18] : memref<1x256xf32, #tpu.memory_space<vmem>>, vector<1x256xf32>
    %36 = arith.addf %35, %29 : vector<1x256xf32>
    %c0_19 = arith.constant 0 : index
    %c0_20 = arith.constant 0 : index
    %37 = vector.load %arg8[%c0_19, %c0_20] : memref<1x256xf32, #tpu.memory_space<vmem>>, vector<1x256xf32>
    tpu.vector_store %arg8[%c0_19, %c0_20], %36 {strides = array<i32>} : memref<1x256xf32, #tpu.memory_space<vmem>>, vector<1x256xf32>,
    %c0_i32_21 = arith.constant 0 : i32
    %38 = arith.cmpi eq, %arg1, %c0_i32_21 : i32
    %39 = arith.extui %38 : i1 to i32
    %c0_i32_22 = arith.constant 0 : i32
    %40 = arith.cmpi ne, %39, %c0_i32_22 : i32
    scf.if %40 {
      %c0_23 = arith.constant 0 : index
      %c0_24 = arith.constant 0 : index
      %41 = vector.load %arg7[%c0_23, %c0_24] : memref<1x256xf32, #tpu.memory_space<vmem>>, vector<1x256xf32>
      %cst_25 = arith.constant dense<0.000000e+00> : vector<1xf32>
      %42 = vector.multi_reduction <add>, %41, %cst_25 [1] : vector<1x256xf32> to vector<1xf32>
      %43 = vector.shape_cast %42 : vector<1xf32> to vector<1x1xf32>
      %c0_26 = arith.constant 0 : index
      %c0_27 = arith.constant 0 : index
      %c0_28 = arith.constant 0 : index
      %44 = vector.load %arg5[%c0_26, %c0_27, %c0_28] : memref<1x1x1xf32, #tpu.memory_space<vmem>>, vector<1x1x1xf32>
      %45 = vector.shape_cast %44 : vector<1x1x1xf32> to vector<1x1xf32>
      %46 = vector.shape_cast %43 : vector<1x1xf32> to vector<1x1x1xf32>
      tpu.vector_store %arg5[%c0_26, %c0_27, %c0_28], %46 {strides = array<i32>} : memref<1x1x1xf32, #tpu.memory_space<vmem>>, vector<1x1x1xf32>,
      %c0_29 = arith.constant 0 : index
      %c0_30 = arith.constant 0 : index
      %47 = vector.load %arg8[%c0_29, %c0_30] : memref<1x256xf32, #tpu.memory_space<vmem>>, vector<1x256xf32>
      %cst_31 = arith.constant dense<0.000000e+00> : vector<1xf32>
      %48 = vector.multi_reduction <add>, %47, %cst_31 [1] : vector<1x256xf32> to vector<1xf32>
      %49 = vector.shape_cast %48 : vector<1xf32> to vector<1x1xf32>
      %c0_32 = arith.constant 0 : index
      %c0_33 = arith.constant 0 : index
      %c0_34 = arith.constant 0 : index
      %50 = vector.load %arg6[%c0_32, %c0_33, %c0_34] : memref<1x1x1xf32, #tpu.memory_space<vmem>>, vector<1x1x1xf32>
      %51 = vector.shape_cast %50 : vector<1x1x1xf32> to vector<1x1xf32>
      %52 = vector.shape_cast %49 : vector<1x1xf32> to vector<1x1x1xf32>
      tpu.vector_store %arg6[%c0_32, %c0_33, %c0_34], %52 {strides = array<i32>} : memref<1x1x1xf32, #tpu.memory_space<vmem>>, vector<1x1x1xf32>,
    } else {
    }
    return
  }
  func.func @transform_0(%arg0: i32, %arg1: i32) -> (i32, i32, i32) {
    %c0_i32 = arith.constant 0 : i32
    %c0_i32_0 = arith.constant 0 : i32
    return %arg0, %c0_i32, %arg1 : i32, i32, i32
  }
  func.func @transform_1(%arg0: i32, %arg1: i32) -> (i32, i32, i32) {
    %c0_i32 = arith.constant 0 : i32
    %c0_i32_0 = arith.constant 0 : i32
    return %arg0, %c0_i32, %arg1 : i32, i32, i32
  }
  func.func @transform_2(%arg0: i32, %arg1: i32) -> (i32, i32) {
    %c0_i32 = arith.constant 0 : i32
    %c0_i32_0 = arith.constant 0 : i32
    %c0_i32_1 = arith.constant 0 : i32
    return %c0_i32, %c0_i32_0 : i32, i32
  }
  func.func @transform_3(%arg0: i32, %arg1: i32) -> (i32, i32, i32) {
    %c0_i32 = arith.constant 0 : i32
    %c0_i32_0 = arith.constant 0 : i32
    %c0_i32_1 = arith.constant 0 : i32
    return %arg0, %c0_i32, %c0_i32_0 : i32, i32, i32
  }
  func.func @transform_4(%arg0: i32, %arg1: i32) -> (i32, i32, i32) {
    %c0_i32 = arith.constant 0 : i32
    %c0_i32_0 = arith.constant 0 : i32
    %c0_i32_1 = arith.constant 0 : i32
    return %arg0, %c0_i32, %c0_i32_0 : i32, i32, i32
  }
}

</mosaic_0001>

<llo_original>
// kernel: tpu_custom_call.1
$region0: #{tpu_custom_call.1}
  #allocation0 [shape = 'u32[]', space=smem, size = 0x4, offset = 0x4, fixed_abs, tag = 'smem constant byte address 0x4 - core index']
  #allocation1 [shape = 'u32[144,128]{1,0:T(1,128)}', space=vmem, size = 0x12000, scoped, tag = 'internal scratch']
  #allocation2 [shape = 'f32[1,256]{1,0:T(1,128)}', space=vmem, size = 0x400, scoped, tag = 'scratch operand']
  #allocation3 [shape = 'f32[1,256]{1,0:T(1,128)}', space=vmem, size = 0x400, scoped, tag = 'scratch operand']
  %s0 = inlined_call_operand.hbm [shape: f32[2,4,256], index: 0, kind: input, shape index: {}]
  %s1 = inlined_call_operand.vmem [shape: s32[2,1,256], index: 1, kind: input, shape index: {}]
  %s2 = inlined_call_operand.vmem [shape: f32[4,1], index: 2, kind: input, shape index: {}]
  %s3 = inlined_call_operand.vmem [shape: f32[2,1,1], index: 3, kind: output, shape index: {0}]
  %s4 = inlined_call_operand.vmem [shape: f32[2,1,1], index: 4, kind: output, shape index: {1}]
  %5 = xla_tuple %s3, %s4
  %s6 = sld [smem:[#allocation0]]
  $region65: #{tpu_custom_call.1} parent=0
    _
  %s8 = ssub.s32 1, %s6
  %s9 = scalar_select 0, %s8, %s6
  $region1: #{tpu_custom_call.1} parent=0
    #allocation4 [shape = 'u8[8192]{0}', space=vmem, size = 0x2000, scoped, tag = 'input window, operand 0']
    #allocation5 [shape = 's32[2]{0}', space=sflag, size = 0x8, scoped, tag = 'scoped memory for tpu_custom_call.1']
    %10 = vsyncpa [#allocation5], 0
    %s11 = scalar_lea.sflag [#allocation5], 1
    %12 = vsyncpa %s11, 0
    loop: start=0, step=1, limit=4
    $region2: #{tpu_custom_call.1} parent=1 // loop_pre_header
      _
    $region3: #{tpu_custom_call.1} parent=1 // loop_header
      %s14 = sphi 0, %s18
      %p15 = scmp.ge.s32.totalorder %s14, 4
      %s21 = sphi 0, %s33
      %s22 = sphi 0, %s29
      %s23 = sphi 0, %s21
      %s24 = sphi 0, %s22
      %s25 = sphi 0, %s23
      %s26 = sphi 0, %s24
      %s38 = sphi 0, %s40
      %s41 = sphi 0, %s38
      %s42 = sphi 0, %s41
      %s58 = sphi 0, %s42
      %s66 = sphi 0, %s68
      %s69 = sphi 0, %s66
      %s70 = sphi 0, %s69
      %s86 = sphi 0, %s70
      %s90 = sphi 0, %s90
      %s92 = sphi 0, %s90
      %s93 = sphi 0, %s92
      %s107 = sphi 0, %s93
      %s113 = sphi 0, %s115
      %s116 = sphi 0, %s113
      %s117 = sphi 0, %s116
      %s133 = sphi 0, %s117
      %s139 = sphi 0, %s141
      %s142 = sphi 0, %s139
      %s143 = sphi 0, %s142
      %s159 = sphi 0, %s143
    $region4: #{tpu_custom_call.1} parent=1 // loop_header_branch
      %17 = sbr.rel (%p15) target = $region8
    $region5: #{tpu_custom_call.1} parent=1 // loop_body
      %s19 = ssub.s32 %s14, 1
      %s20 = ssub.s32 %s14, 2
      %s27 = sadd.s32 1, %s22
      %p28 = scmp.ge.s32.totalorder %s27, 1
      %s29 = scalar_select %p28, 0, %s27
      %s30 = sadd.s32 1, %s21
      %s31 = scalar_select %p28, %s30, %s21
      %p32 = scmp.ge.s32.totalorder %s31, 2
      %s33 = scalar_select %p32, 0, %s31
      %s34 = ssub.s32 %s21, %s33
      %s35 = ssub.s32 %s22, %s29
      %s36 = sor.u32 %s34, %s35
      %p37 = scmp.eq.s32.totalorder %s36, 0
      %s39 = sadd.s32 %s38, 1
      %s40 = scalar_select %p37, %s38, %s39
      %p43 = pneg %p37
      %p44 = scmp.eq.s32.totalorder %s14, 1
      %p45 = por %p43, %p44
      %p46 = scmp.ne.s32.totalorder %s38, %s41
      %p47 = scmp.eq.s32.totalorder %s14, 0
      %p48 = por %p46, %p47
      %p49 = scmp.ne.s32.totalorder %s38, %s41
      %p50 = scmp.eq.s32.totalorder %s19, 1
      %p51 = por %p49, %p50
      %p52 = scmp.ne.s32.totalorder %s41, %s42
      %p53 = scmp.eq.s32.totalorder %s19, 0
      %p54 = por %p52, %p53
      %p55 = scmp.ne.s32.totalorder %s41, %s42
      %p56 = scmp.eq.s32.totalorder %s20, 1
      %p57 = por %p55, %p56
      %p59 = scmp.ne.s32.totalorder %s42, %s58
      %p60 = scmp.eq.s32.totalorder %s20, 0
      %p61 = por %p59, %p60
      %s62 = ssub.s32 %s21, %s33
      %s63 = ssub.s32 %s22, %s29
      %s64 = sor.u32 %s62, %s63
      %p65 = scmp.eq.s32.totalorder %s64, 0
      %s67 = sadd.s32 %s66, 1
      %s68 = scalar_select %p65, %s66, %s67
      %p71 = pneg %p65
      %p72 = scmp.eq.s32.totalorder %s14, 1
      %p73 = por %p71, %p72
      %p74 = scmp.ne.s32.totalorder %s66, %s69
      %p75 = scmp.eq.s32.totalorder %s14, 0
      %p76 = por %p74, %p75
      %p77 = scmp.ne.s32.totalorder %s66, %s69
      %p78 = scmp.eq.s32.totalorder %s19, 1
      %p79 = por %p77, %p78
      %p80 = scmp.ne.s32.totalorder %s69, %s70
      %p81 = scmp.eq.s32.totalorder %s19, 0
      %p82 = por %p80, %p81
      %p83 = scmp.ne.s32.totalorder %s69, %s70
      %p84 = scmp.eq.s32.totalorder %s20, 1
      %p85 = por %p83, %p84
      %p87 = scmp.ne.s32.totalorder %s70, %s86
      %p88 = scmp.eq.s32.totalorder %s20, 0
      %p89 = por %p87, %p88
      %s91 = sadd.s32 %s90, 1
      %p94 = scmp.eq.s32.totalorder %s14, 1
      %p95 = scmp.ne.s32.totalorder %s90, %s92
      %p96 = scmp.eq.s32.totalorder %s14, 0
      %p97 = por %p95, %p96
      %p98 = scmp.ne.s32.totalorder %s90, %s92
      %p99 = scmp.eq.s32.totalorder %s19, 1
      %p100 = por %p98, %p99
      %p101 = scmp.ne.s32.totalorder %s92, %s93
      %p102 = scmp.eq.s32.totalorder %s19, 0
      %p103 = por %p101, %p102
      %p104 = scmp.ne.s32.totalorder %s92, %s93
      %p105 = scmp.eq.s32.totalorder %s20, 1
      %p106 = por %p104, %p105
      %p108 = scmp.ne.s32.totalorder %s93, %s107
      %p109 = scmp.eq.s32.totalorder %s20, 0
      %p110 = por %p108, %p109
      %s111 = ssub.s32 %s21, %s33
      %p112 = scmp.eq.s32.totalorder %s111, 0
      %s114 = sadd.s32 %s113, 1
      %s115 = scalar_select %p112, %s113, %s114
      %p118 = pneg %p112
      %p119 = scmp.eq.s32.totalorder %s14, 1
      %p120 = por %p118, %p119
      %p121 = scmp.ne.s32.totalorder %s113, %s116
      %p122 = scmp.eq.s32.totalorder %s14, 0
      %p123 = por %p121, %p122
      %p124 = scmp.ne.s32.totalorder %s113, %s116
      %p125 = scmp.eq.s32.totalorder %s19, 1
      %p126 = por %p124, %p125
      %p127 = scmp.ne.s32.totalorder %s116, %s117
      %p128 = scmp.eq.s32.totalorder %s19, 0
      %p129 = por %p127, %p128
      %p130 = scmp.ne.s32.totalorder %s116, %s117
      %p131 = scmp.eq.s32.totalorder %s20, 1
      %p132 = por %p130, %p131
      %p134 = scmp.ne.s32.totalorder %s117, %s133
      %p135 = scmp.eq.s32.totalorder %s20, 0
      %p136 = por %p134, %p135
      %s137 = ssub.s32 %s21, %s33
      %p138 = scmp.eq.s32.totalorder %s137, 0
      %s140 = sadd.s32 %s139, 1
      %s141 = scalar_select %p138, %s139, %s140
      %p144 = pneg %p138
      %p145 = scmp.eq.s32.totalorder %s14, 1
      %p146 = por %p144, %p145
      %p147 = scmp.ne.s32.totalorder %s139, %s142
      %p148 = scmp.eq.s32.totalorder %s14, 0
      %p149 = por %p147, %p148
      %p150 = scmp.ne.s32.totalorder %s139, %s142
      %p151 = scmp.eq.s32.totalorder %s19, 1
      %p152 = por %p150, %p151
      %p153 = scmp.ne.s32.totalorder %s142, %s143
      %p154 = scmp.eq.s32.totalorder %s19, 0
      %p155 = por %p153, %p154
      %p156 = scmp.ne.s32.totalorder %s142, %s143
      %p157 = scmp.eq.s32.totalorder %s20, 1
      %p158 = por %p156, %p157
      %p160 = scmp.ne.s32.totalorder %s143, %s159
      %p161 = scmp.eq.s32.totalorder %s20, 0
      %p162 = por %p160, %p161
      %p163 = scmp.le.s32.totalorder 1, %s14
      %p164 = scmp.lt.s32.totalorder %s14, 3
      %p165 = pnand %p163, %p164
      %p166 = pneg %p165
      // Predicated region
      $region9: #{tpu_custom_call.1} parent=5 // pred_check
        _
      $region10: #{tpu_custom_call.1} parent=5 // pred_check_branch
        %168 = sbr.rel (%p165) target = $region12
      $region11: #{tpu_custom_call.1} parent=5 // pred_region
        %s169 = ssub.s32 %s14, 1
        // Predicated region
        $region13: #{tpu_custom_call.1} parent=11 // pred_check
          %p170 = pneg %p103
        $region14: #{tpu_custom_call.1} parent=11 // pred_check_branch
          %172 = sbr.rel (%p170) target = $region16
        $region15: #{tpu_custom_call.1} parent=11 // pred_region
          _
        $region16: #{tpu_custom_call.1} parent=11 // pred_fallthru
          _
      $region12: #{tpu_custom_call.1} parent=5 // pred_fallthru
        _
      %p173 = scmp.lt.s32.totalorder %s14, 2
      // Predicated region
      $region17: #{tpu_custom_call.1} parent=5 // pred_check
        %p174 = pneg %p173
      $region18: #{tpu_custom_call.1} parent=5 // pred_check_branch
        %176 = sbr.rel (%p174) target = $region20
      $region19: #{tpu_custom_call.1} parent=5 // pred_region
        // Predicated region
        $region21: #{tpu_custom_call.1} parent=19 // pred_check
          %p177 = pneg %p48
        $region22: #{tpu_custom_call.1} parent=19 // pred_check_branch
          %179 = sbr.rel (%p177) target = $region24
        $region23: #{tpu_custom_call.1} parent=19 // pred_region
          %s180 = sand.u32 %s38, 1
          %s181 = scalar_lea.sflag [#allocation5], %s180
          %s182 = sand.u32 %s38, 1
          %s183 = smul.addr %s182, 8
          %s184 = scalar_lea.vmem [#allocation4], %s183
          %s185 = smul.u32 2, %s22
          %s187 = ssub.s32 128, 128
          %188 = vsyncadd %s181, %s187
          %s189 = smul.addr %s21, 2
          %s190 = sadd.s32 %s185, %s189
          %s191 = smul.addr %s190, 64
          %s192 = scalar_lea.hbm %s0, %s191
          %s194 = sshll.u32 %s184, 4
          %s195 = int_to_ptr.vmem [resolvable:$true] %s194
          %197 = dma.hbm_to_vmem [thread:$0]  %s192, 128, %s195, %s181
        $region24: #{tpu_custom_call.1} parent=19 // pred_fallthru
          _
        // Predicated region
        $region25: #{tpu_custom_call.1} parent=19 // pred_check
          %p198 = pneg %p76
        $region26: #{tpu_custom_call.1} parent=19 // pred_check_branch
          %200 = sbr.rel (%p198) target = $region28
        $region27: #{tpu_custom_call.1} parent=19 // pred_region
          %s201 = smul.u32 2, %s22
          %p202 = scmp.lt.s32.totalorder %s21, 1
          %s203 = scalar_select %p202, %s21, 1
          %p204 = scmp.lt.s32.totalorder %s201, 1
          %s205 = scalar_select %p204, %s201, 1
          %s206 = smul.addr %s203, 2
          %s207 = sadd.s32 %s205, %s206
          %s208 = scalar_lea.vmem %s1, %s207
          %s209 = smul.u32 2, %s22
        $region28: #{tpu_custom_call.1} parent=19 // pred_fallthru
          _
      $region20: #{tpu_custom_call.1} parent=5 // pred_fallthru
        _
      %p210 = scmp.le.s32.totalorder 1, %s14
      %p211 = scmp.lt.s32.totalorder %s14, 3
      %p212 = pnand %p210, %p211
      %p213 = pneg %p212
      // Predicated region
      $region29: #{tpu_custom_call.1} parent=5 // pred_check
        _
      $region30: #{tpu_custom_call.1} parent=5 // pred_check_branch
        %215 = sbr.rel (%p212) target = $region32
      $region31: #{tpu_custom_call.1} parent=5 // pred_region
        %s216 = ssub.s32 %s14, 1
        %s217 = sand.u32 %s41, 1
        %s218 = scalar_lea.sflag [#allocation5], %s217
        %s219 = sand.u32 %s41, 1
        %s220 = smul.addr %s219, 8
        %s221 = scalar_lea.vmem [#allocation4], %s220
        // Predicated region
        $region33: #{tpu_custom_call.1} parent=31 // pred_check
          %p222 = pneg %p54
        $region34: #{tpu_custom_call.1} parent=31 // pred_check_branch
          %224 = sbr.rel (%p222) target = $region36
        $region35: #{tpu_custom_call.1} parent=31 // pred_region
          %225 = dma.done %s218, 128
        $region36: #{tpu_custom_call.1} parent=31 // pred_fallthru
          _
        %s226 = sand.u32 %s41, 1
        %s227 = scalar_lea.sflag [#allocation5], %s226
        %s228 = sand.u32 %s41, 1
        %s229 = smul.addr %s228, 8
        %s230 = scalar_lea.vmem [#allocation4], %s229
        %p231 = pneg %p54
        %p232 = pneg %p51
        %s233 = smul.u32 2, %s24
        %p234 = scmp.lt.s32.totalorder %s23, 1
        %s235 = scalar_select %p234, %s23, 1
        %p236 = scmp.lt.s32.totalorder %s233, 1
        %s237 = scalar_select %p236, %s233, 1
        %s238 = smul.addr %s235, 2
        %s239 = sadd.s32 %s237, %s238
        %s240 = scalar_lea.vmem %s1, %s239
        %p241 = pneg %p82
        %p242 = pneg %p79
        %p243 = pneg %p103
        %p244 = pneg %p100
        %p245 = pneg %p129
        %p246 = pneg %p126
        %p247 = scmp.lt.s32.totalorder %s23, 1
        %s248 = scalar_select %p247, %s23, 1
        %s249 = scalar_lea.vmem %s3, %s248
        %p250 = pneg %p155
        %p251 = pneg %p152
        %p252 = scmp.lt.s32.totalorder %s23, 1
        %s253 = scalar_select %p252, %s23, 1
        %s254 = scalar_lea.vmem %s4, %s253
        %s255 = smul.u32 2, %s24
        %s256 = smul.u32 2, %s24
        %p257 = scmp.lt.s32.totalorder %s23, 1
        %s258 = scalar_select %p257, %s23, 1
        %p259 = scmp.lt.s32.totalorder %s256, 1
        %s260 = scalar_select %p259, %s256, 1
        %s261 = smul.addr %s258, 2
        %s262 = sadd.s32 %s260, %s261
        %s263 = scalar_lea.vmem %s1, %s262
        %s264 = smul.u32 2, %s24
        %p265 = scmp.lt.s32.totalorder %s23, 1
        %s266 = scalar_select %p265, %s23, 1
        %s267 = scalar_lea.vmem %s3, %s266
        %p268 = scmp.lt.s32.totalorder %s23, 1
        %s269 = scalar_select %p268, %s23, 1
        %s270 = scalar_lea.vmem %s4, %s269
        %p271 = scmp.eq.s32.totalorder %s24, 0
        // Predicated region
        $region37: #{tpu_custom_call.1} parent=31 // pred_check
          %p272 = pneg %p271
        $region38: #{tpu_custom_call.1} parent=31 // pred_check_branch
          %274 = sbr.rel (%p272) target = $region40
        $region39: #{tpu_custom_call.1} parent=31 // pred_region
          %v275 = vlaneseq
          %vm276 = vcmp.ge.s32.totalorder %v275, 0
          %vm277 = vcmp.lt.s32.totalorder %v275, 256
          %vm278 = vmand %vm276, %vm277
          %279 = vst.msk [vmem:[#allocation2] sm:$0x3] %vm278, 0.0
          %280 = vst.msk [vmem:[#allocation3] sm:$0x3] %vm278, 0.0
        $region40: #{tpu_custom_call.1} parent=31 // pred_fallthru
          _
        %v281 = vld [vmem:[%s221] sm:$0xff]
        %v282 = vld [vmem:[%s263] sm:$0x3]
        %v283 = vld [vmem:[%s2] sm:$0xf]
        %v285 = vcombine.high %v281, %v281
        %vm287 = vcmask 1043456
        %v288 = vsel %vm287, %v281, -inf
        %v289 = vrot.slane %v288, 4
        %v290 = vmax.f32 %v288, %v289
        %v291 = vrot.slane %v290, 2
        %v292 = vmax.f32 %v290, %v291
        %v293 = vrot.slane %v292, 1
        %v294 = vmax.f32 %v292, %v293
        %v295 = vsel %vm287, %v285, -inf
        %v296 = vrot.slane %v295, 4
        %v297 = vmax.f32 %v295, %v296
        %v298 = vrot.slane %v297, 2
        %v299 = vmax.f32 %v297, %v298
        %v300 = vrot.slane %v299, 1
        %v301 = vmax.f32 %v299, %v300
        %v304 = vcombine.low %v294, %v301
        %v306 = vsub.f32 %v281, %v304
        %v307 = vmul.f32 %v306, 1.442695
        %v308 = vpow.pop %v307
        %v310 = vcombine.high %v308, %v308
        %v312 = vsel %vm287, %v308, 0.0
        %v313 = vrot.slane %v312, 4
        %v314 = vadd.f32 %v312, %v313
        %v315 = vrot.slane %v314, 2
        %v316 = vadd.f32 %v314, %v315
        %v317 = vrot.slane %v316, 1
        %v318 = vadd.f32 %v316, %v317
        %v319 = vsel %vm287, %v310, 0.0
        %v320 = vrot.slane %v319, 4
        %v321 = vadd.f32 %v319, %v320
        %v322 = vrot.slane %v321, 2
        %v323 = vadd.f32 %v321, %v322
        %v324 = vrot.slane %v323, 1
        %v325 = vadd.f32 %v323, %v324
        %v326 = vlog2.pop %v318
        %v327 = vmul.f32 %v326, 0.6931472
        %v328 = vlog2.pop %v325
        %v329 = vmul.f32 %v328, 0.6931472
        %v330 = vadd.f32 %v327, %v294
        %v331 = vadd.f32 %v329, %v301
        %v332 = vlaneseq
        %v333 = vshrl.u32 %v332, 7
        %v334 = vlaneseq
        %v335 = vshrl.u32 %v334, 7
        %v336 = vsub.s32 0, %v335
        %v337 = vrot.slane %v282, %v336
        %v338 = vlaneseq
        %v339 = vshrl.u32 %v338, 7
        %v340 = vsub.s32 1, %v339
        %v341 = vrot.slane %v282, %v340
        %vm342 = vcmp.eq.s32.totalorder %v333, %v337
        %vm343 = vcmp.eq.s32.totalorder %v333, %v341
        %v344 = vsel %vm342, %v281, 0.0
        %v345 = vsel %vm343, %v285, 0.0
        %v346 = vsel %vm287, %v344, 0.0
        %v347 = vrot.slane %v346, 4
        %v348 = vadd.f32 %v346, %v347
        %v349 = vrot.slane %v348, 2
        %v350 = vadd.f32 %v348, %v349
        %v351 = vrot.slane %v350, 1
        %v352 = vadd.f32 %v350, %v351
        %v353 = vsel %vm287, %v345, 0.0
        %v354 = vrot.slane %v353, 4
        %v355 = vadd.f32 %v353, %v354
        %v356 = vrot.slane %v355, 2
        %v357 = vadd.f32 %v355, %v356
        %v358 = vrot.slane %v357, 1
        %v359 = vadd.f32 %v357, %v358
        %361 = vset.pattern.permute.xlu0 0
        %362 = vperm.xlu0 %361, %v283
        %v363 = vpop.permute.xlu0 %362
        %v365 = vsel %vm342, %v363, 0.0
        %v366 = vsel %vm343, %v363, 0.0
        %v367 = vsel %vm287, %v365, 0.0
        %v368 = vrot.slane %v367, 4
        %v369 = vadd.f32 %v367, %v368
        %v370 = vrot.slane %v369, 2
        %v371 = vadd.f32 %v369, %v370
        %v372 = vrot.slane %v371, 1
        %v373 = vadd.f32 %v371, %v372
        %v374 = vsel %vm287, %v366, 0.0
        %v375 = vrot.slane %v374, 4
        %v376 = vadd.f32 %v374, %v375
        %v377 = vrot.slane %v376, 2
        %v378 = vadd.f32 %v376, %v377
        %v379 = vrot.slane %v378, 1
        %v380 = vadd.f32 %v378, %v379
        %v381 = vsub.f32 %v330, %v352
        %v382 = vsub.f32 %v331, %v359
        %v383 = vmul.f32 %v373, %v381
        %v384 = vmul.f32 %v380, %v382
        %v385 = vld [vmem:[#allocation2] sm:$0x3]
        %v388 = vcombine.low %v383, %v384
        %v390 = vunpack.c.l.s4 1966171168
        %v391 = vunpack.c.0.s8 %v390
        %v392 = vlaneseq
        %v393 = vshrl.u32 %v392, 7
        %v394 = vsub.s32 %v391, %v393
        %v395 = vrot.slane %v388, %v394
        %v397 = vunpack.c.l.s4 1966171168
        %v398 = vunpack.c.0.s8 %v397
        %v399 = vlaneseq
        %v400 = vshrl.u32 %v399, 7
        %v401 = vsub.s32 %v398, %v400
        %v402 = vrot.slane %v395, %v401
        %v404 = vadd.f32 %v385, %v402
        %v405 = vlaneseq
        %vm406 = vcmp.ge.s32.totalorder %v405, 0
        %vm407 = vcmp.lt.s32.totalorder %v405, 256
        %vm408 = vmand %vm406, %vm407
        %409 = vst.msk [vmem:[#allocation2] sm:$0x3] %vm408, %v404
        %v410 = vld [vmem:[#allocation3] sm:$0x3]
        %v413 = vcombine.low %v373, %v380
        %v415 = vunpack.c.l.s4 1966171168
        %v416 = vunpack.c.0.s8 %v415
        %v417 = vlaneseq
        %v418 = vshrl.u32 %v417, 7
        %v419 = vsub.s32 %v416, %v418
        %v420 = vrot.slane %v413, %v419
        %v422 = vunpack.c.l.s4 1966171168
        %v423 = vunpack.c.0.s8 %v422
        %v424 = vlaneseq
        %v425 = vshrl.u32 %v424, 7
        %v426 = vsub.s32 %v423, %v425
        %v427 = vrot.slane %v420, %v426
        %v429 = vadd.f32 %v410, %v427
        %430 = vst.msk [vmem:[#allocation3] sm:$0x3] %vm408, %v429
        // Predicated region
        $region41: #{tpu_custom_call.1} parent=31 // pred_check
          %p431 = pneg %p271
        $region42: #{tpu_custom_call.1} parent=31 // pred_check_branch
          %433 = sbr.rel (%p431) target = $region44
        $region43: #{tpu_custom_call.1} parent=31 // pred_region
          %v434 = vld [vmem:[#allocation2] sm:$0x3]
          %v436 = vlaneseq
          %v437 = vshrl.u32 %v436, 7
          %v438 = vsub.s32 0, %v437
          %v439 = vrot.slane %v434, %v438
          %v440 = vlaneseq
          %v441 = vshrl.u32 %v440, 7
          %v442 = vsub.s32 1, %v441
          %v443 = vrot.slane %v434, %v442
          %vm446 = vcmask 1040384
          %v447 = vsel %vm446, %v439, 0.0
          %v448 = vsel %vm446, %v443, 0.0
          %v449 = vadd.f32 %v447, %v448
          %450 = vadd.xlane.f32.xlu0 %v449
          %v451 = vpop.xlane.xlu0 %450
          %vm452 = vcmask 0
          %453 = vst.msk [vmem:[%s267] sm:$0x1] %vm452, %v451
          %v454 = vld [vmem:[#allocation3] sm:$0x3]
          %v456 = vlaneseq
          %v457 = vshrl.u32 %v456, 7
          %v458 = vsub.s32 0, %v457
          %v459 = vrot.slane %v454, %v458
          %v460 = vlaneseq
          %v461 = vshrl.u32 %v460, 7
          %v462 = vsub.s32 1, %v461
          %v463 = vrot.slane %v454, %v462
          %v466 = vsel %vm446, %v459, 0.0
          %v467 = vsel %vm446, %v463, 0.0
          %v468 = vadd.f32 %v466, %v467
          %469 = vadd.xlane.f32.xlu0 %v468
          %v470 = vpop.xlane.xlu0 %469
          %471 = vst.msk [vmem:[%s270] sm:$0x1] %vm452, %v470
        $region44: #{tpu_custom_call.1} parent=31 // pred_fallthru
          _
        %p472 = scmp.lt.s32.totalorder %s23, 1
        %s473 = scalar_select %p472, %s23, 1
        %s474 = scalar_lea.vmem %s3, %s473
        %p475 = scmp.lt.s32.totalorder %s23, 1
        %s476 = scalar_select %p475, %s23, 1
        %s477 = scalar_lea.vmem %s4, %s476
        // Predicated region
        $region45: #{tpu_custom_call.1} parent=31 // pred_check
          %p478 = pneg %p126
        $region46: #{tpu_custom_call.1} parent=31 // pred_check_branch
          %480 = sbr.rel (%p478) target = $region48
        $region47: #{tpu_custom_call.1} parent=31 // pred_region
          _
        $region48: #{tpu_custom_call.1} parent=31 // pred_fallthru
          _
        // Predicated region
        $region49: #{tpu_custom_call.1} parent=31 // pred_check
          %p481 = pneg %p152
        $region50: #{tpu_custom_call.1} parent=31 // pred_check_branch
          %483 = sbr.rel (%p481) target = $region52
        $region51: #{tpu_custom_call.1} parent=31 // pred_region
          _
        $region52: #{tpu_custom_call.1} parent=31 // pred_fallthru
          _
      $region32: #{tpu_custom_call.1} parent=5 // pred_fallthru
        _
      %p484 = scmp.le.s32.totalorder 2, %s14
      // Predicated region
      $region53: #{tpu_custom_call.1} parent=5 // pred_check
        %p485 = pneg %p484
      $region54: #{tpu_custom_call.1} parent=5 // pred_check_branch
        %487 = sbr.rel (%p485) target = $region56
      $region55: #{tpu_custom_call.1} parent=5 // pred_region
        %s488 = ssub.s32 %s14, 2
        // Predicated region
        $region57: #{tpu_custom_call.1} parent=55 // pred_check
          %p489 = pneg %p132
        $region58: #{tpu_custom_call.1} parent=55 // pred_check_branch
          %491 = sbr.rel (%p489) target = $region60
        $region59: #{tpu_custom_call.1} parent=55 // pred_region
          %p492 = scmp.lt.s32.totalorder %s25, 1
          %s493 = scalar_select %p492, %s25, 1
          %s494 = scalar_lea.vmem %s3, %s493
        $region60: #{tpu_custom_call.1} parent=55 // pred_fallthru
          _
        // Predicated region
        $region61: #{tpu_custom_call.1} parent=55 // pred_check
          %p495 = pneg %p158
        $region62: #{tpu_custom_call.1} parent=55 // pred_check_branch
          %497 = sbr.rel (%p495) target = $region64
        $region63: #{tpu_custom_call.1} parent=55 // pred_region
          %p498 = scmp.lt.s32.totalorder %s25, 1
          %s499 = scalar_select %p498, %s25, 1
          %s500 = scalar_lea.vmem %s4, %s499
        $region64: #{tpu_custom_call.1} parent=55 // pred_fallthru
          _
      $region56: #{tpu_custom_call.1} parent=5 // pred_fallthru
        _
    $region6: #{tpu_custom_call.1} parent=1 // loop_footer
      %s18 = sadd.s32 1, %s14
    $region7: #{tpu_custom_call.1} parent=1 // loop_footer_branch
      %13 = sbr.rel target = $region3
    $region8: #{tpu_custom_call.1} parent=1 // loop_exit
      _
    %501 = vsyncpa [#allocation5], 1
    %s502 = scalar_lea.sflag [#allocation5], 1
    %503 = vsyncpa %s502, 1

</llo_original>
